<compile_context>
chip_gen: v7x
topology: tpu7x:2x2x1
jax: 0.10.0
libtpu: 0.0.40
codegen_flags: <defaults>
</compile_context>

<pallas_src>
import jax
import jax.numpy as jnp
from jax.experimental import pallas as pl
from jax.experimental.pallas import tpu as pltpu

_LANES = 128


def _hard_sigmoid_kernel(x_ref, o_ref):
    x = x_ref[...].astype(jnp.float32)
    y = jnp.clip(x * 0.2 + 0.5, 0.0, 1.0)
    o_ref[...] = y.astype(o_ref.dtype)


def _sublane_align(dtype) -> int:
    itemsize = jnp.dtype(dtype).itemsize
    return {4: 8, 2: 16, 1: 32}.get(itemsize, 8)


def hard_sigmoid(x: jax.Array, *, target_tile_bytes: int = 2 * 1024 * 1024) -> jax.Array:
    """Elementwise hard-sigmoid (x*0.2 + 0.5 clamped to [0,1]) via Pallas TPU."""
    orig_shape = x.shape
    dtype = x.dtype
    n = x.size
    itemsize = jnp.dtype(dtype).itemsize
    sublane = _sublane_align(dtype)

    # Lane-dense flat view. No copy when n is a multiple of 128 (typical for
    # conv activations); otherwise pad only the < 128-element tail.
    rem = n % _LANES
    if rem:
        flat = jnp.pad(x.reshape(-1), (0, _LANES - rem))
    else:
        flat = x.reshape(-1)
    rows = flat.size // _LANES
    x2d = flat.reshape(rows, _LANES)

    # Byte-targeted, dtype-aligned tile; clamp to the real row count so tiny
    # inputs don't stream padded garbage.
    tile_rows = max(sublane, target_tile_bytes // (_LANES * itemsize))
    tile_rows = (tile_rows // sublane) * sublane
    if tile_rows >= rows:
        tile_rows = rows  # single block covering the full (possibly unaligned) dim

    grid = (pl.cdiv(rows, tile_rows),)
    out2d = pl.pallas_call(
        _hard_sigmoid_kernel,
        out_shape=jax.ShapeDtypeStruct((rows, _LANES), dtype),
        grid_spec=pltpu.PrefetchScalarGridSpec(
            num_scalar_prefetch=0,
            grid=grid,
            in_specs=[pl.BlockSpec((tile_rows, _LANES), lambda i: (i, 0))],
            out_specs=pl.BlockSpec((tile_rows, _LANES), lambda i: (i, 0)),
        ),
        compiler_params=pltpu.CompilerParams(
            dimension_semantics=("parallel",),
        ),
    )(x2d)

    out = out2d.reshape(-1)
    if rem:
        out = out[:n]
    return out.reshape(orig_shape)


def _reference(x):
    return jnp.maximum(0.0, jnp.minimum(1.0, x * 0.2 + 0.5)).astype(x.dtype)


if __name__ == "__main__":
    key = jax.random.PRNGKey(0)

    # NCHW input, matching typical MobileNetV3 activation usage.
    x = jax.random.normal(key, (2, 4, 16, 16), dtype=jnp.float32) * 5.0
    y = jax.block_until_ready(hard_sigmoid(x))
    y_ref = _reference(x)
    assert y.shape == x.shape and y.dtype == x.dtype
    assert jnp.allclose(y, y_ref, atol=1e-6), "mismatch vs reference (aligned case)"

    # Ragged case (size not a multiple of 128) exercises the tail-pad path.
    x2 = jax.random.normal(jax.random.PRNGKey(1), (3, 5, 7), dtype=jnp.float32) * 5.0
    y2 = jax.block_until_ready(hard_sigmoid(x2))
    assert y2.shape == x2.shape and y2.dtype == x2.dtype
    assert jnp.allclose(y2, _reference(x2), atol=1e-6), "mismatch vs reference (ragged case)"

    print("KERNEL_OK")
</pallas_src>

<mosaic_0001>
module attributes {stable_mosaic.version = 11 : i64} {
  func.func @_hard_sigmoid_kernel(%arg0: i32, %arg1: memref<16x128xf32, #tpu.memory_space<vmem>>, %arg2: memref<16x128xf32, #tpu.memory_space<vmem>>) attributes {dimension_semantics = [#tpu.dimension_semantics<parallel>], iteration_bounds = array<i64: 1>, scalar_prefetch = 0 : i64, scratch_operands = 0 : i64, tpu.core_type = #tpu.core_type<tc>, window_params = [{transform_indices = @transform_0, window_bounds = array<i64: 16, 128>}, {transform_indices = @transform_1, window_bounds = array<i64: 16, 128>}]} {
    %c0 = arith.constant 0 : index
    %c0_0 = arith.constant 0 : index
    %0 = vector.load %arg1[%c0, %c0_0] : memref<16x128xf32, #tpu.memory_space<vmem>>, vector<16x128xf32>
    %cst = arith.constant 2.000000e-01 : f32
    %1 = vector.broadcast %cst : f32 to vector<16x128xf32>
    %2 = arith.mulf %0, %1 : vector<16x128xf32>
    %cst_1 = arith.constant 5.000000e-01 : f32
    %3 = vector.broadcast %cst_1 : f32 to vector<16x128xf32>
    %4 = arith.addf %2, %3 : vector<16x128xf32>
    %cst_2 = arith.constant 0.000000e+00 : f32
    %cst_3 = arith.constant 1.000000e+00 : f32
    %5 = vector.broadcast %cst_2 : f32 to vector<16x128xf32>
    %6 = arith.maximumf %5, %4 : vector<16x128xf32>
    %7 = vector.broadcast %cst_3 : f32 to vector<16x128xf32>
    %8 = arith.minimumf %7, %6 : vector<16x128xf32>
    %c0_4 = arith.constant 0 : index
    %c0_5 = arith.constant 0 : index
    %9 = vector.load %arg2[%c0_4, %c0_5] : memref<16x128xf32, #tpu.memory_space<vmem>>, vector<16x128xf32>
    tpu.vector_store %arg2[%c0_4, %c0_5], %8 {strides = array<i32>} : memref<16x128xf32, #tpu.memory_space<vmem>>, vector<16x128xf32>,
    return
  }
  func.func @transform_0(%arg0: i32) -> (i32, i32) {
    %c0_i32 = arith.constant 0 : i32
    %c0_i32_0 = arith.constant 0 : i32
    return %arg0, %c0_i32 : i32, i32
  }
  func.func @transform_1(%arg0: i32) -> (i32, i32) {
    %c0_i32 = arith.constant 0 : i32
    %c0_i32_0 = arith.constant 0 : i32
    return %arg0, %c0_i32 : i32, i32
  }
}

</mosaic_0001>

<llo_original>
// kernel: tpu_custom_call.1
$region0: #{tpu_custom_call.1}
  #allocation0 [shape = 'u32[]', space=smem, size = 0x4, offset = 0x4, fixed_abs, tag = 'smem constant byte address 0x4 - core index']
  #allocation1 [shape = 'u32[144,128]{1,0:T(1,128)}', space=vmem, size = 0x12000, scoped, tag = 'internal scratch']
  %s0 = inlined_call_operand.hbm [shape: f32[16,128], index: 0, kind: input, shape index: {}]
  %s1 = inlined_call_operand.hbm [shape: f32[16,128], index: 1, kind: output, shape index: {}]
  %s2 = sld [smem:[#allocation0]]
  $region18: #{tpu_custom_call.1} parent=0
    _
  %s4 = ssub.s32 1, %s2
  %s5 = scalar_select 0, %s4, %s2
  $region1: #{tpu_custom_call.1} parent=0
    #allocation2 [shape = 'u8[8192]{0}', space=vmem, size = 0x2000, scoped, tag = 'input window, operand 0, single buffered']
    #allocation3 [shape = 's32[1]{0}', space=sflag, size = 0x4, scoped, tag = 'scoped memory for tpu_custom_call.1']
    #allocation4 [shape = 's32[1]{0}', space=sflag, size = 0x4, scoped, tag = 'scoped memory for tpu_custom_call.1']
    #allocation5 [shape = 'u8[8192]{0}', space=vmem, size = 0x2000, scoped, tag = 'output window, operand 0, single buffered']
    %6 = vsyncpa [#allocation3], 0
    %7 = vsyncpa [#allocation4], 0
    // Predicated region
    $region2: #{tpu_custom_call.1} parent=1 // pred_check
      _
    $region3: #{tpu_custom_call.1} parent=1 // pred_check_branch
      %9 = sbr.rel (0) target = $region5
    $region4: #{tpu_custom_call.1} parent=1 // pred_region
      %s11 = ssub.s32 256, 256
      %12 = vsyncadd [#allocation3], %s11
      %s13 = sshll.u32 [#allocation2], 4
      %s14 = int_to_ptr.vmem [resolvable:$true] %s13
      %19 = dma.hbm_to_vmem [thread:$0]  %s0, 256, %s14, [#allocation3], 128, 128, 8
    $region5: #{tpu_custom_call.1} parent=1 // pred_fallthru
      _
    // Predicated region
    $region6: #{tpu_custom_call.1} parent=1 // pred_check
      _
    $region7: #{tpu_custom_call.1} parent=1 // pred_check_branch
      %21 = sbr.rel (0) target = $region9
    $region8: #{tpu_custom_call.1} parent=1 // pred_region
      %22 = dma.done [#allocation3], 256
    $region9: #{tpu_custom_call.1} parent=1 // pred_fallthru
      _
    %v23 = vld [vmem:[#allocation2] sm:$0xff]
    %v24 = vld [vmem:[#allocation2 + $0x8] sm:$0xff]
    %v25 = vmul.f32 %v23, 0.2
    %v26 = vmul.f32 %v24, 0.2
    %v27 = vadd.f32 %v25, 0.5
    %v28 = vadd.f32 %v26, 0.5
    %v29 = vmax.f32 %v27, 0.0
    %v30 = vmax.f32 %v28, 0.0
    %v31 = vmin.f32 %v29, 1.0
    %v32 = vmin.f32 %v30, 1.0
    %33 = vst [vmem:[#allocation5] sm:$0xff] %v31
    %34 = vst [vmem:[#allocation5 + $0x8] sm:$0xff] %v32
    // Predicated region
    $region10: #{tpu_custom_call.1} parent=1 // pred_check
      _
    $region11: #{tpu_custom_call.1} parent=1 // pred_check_branch
      %36 = sbr.rel (0) target = $region13
    $region12: #{tpu_custom_call.1} parent=1 // pred_region
      %s38 = ssub.s32 256, 256
      %39 = vsyncadd [#allocation4], %s38
      %s40 = sshll.u32 [#allocation5], 4
      %s41 = int_to_ptr.vmem [resolvable:$true] %s40
      %46 = dma.vmem_to_hbm [thread:$0]  %s41, 256, %s1, [#allocation4], 128, 128, 8
    $region13: #{tpu_custom_call.1} parent=1 // pred_fallthru
      _
    // Predicated region
    $region14: #{tpu_custom_call.1} parent=1 // pred_check
      _
    $region15: #{tpu_custom_call.1} parent=1 // pred_check_branch
      %48 = sbr.rel (0) target = $region17
    $region16: #{tpu_custom_call.1} parent=1 // pred_region
      %49 = dma.done [#allocation4], 256
    $region17: #{tpu_custom_call.1} parent=1 // pred_fallthru
      _
    %50 = vsyncpa [#allocation3], 1
    %51 = vsyncpa [#allocation4], 1

</llo_original>
